<compile_context>
chip_gen: v7x
topology: tpu7x:2x2x1
jax: 0.10.0
libtpu: 0.0.40
codegen_flags: <defaults>
</compile_context>

<pallas_src>
import functools
import itertools

import jax
import jax.numpy as jnp
from jax.experimental import pallas as pl
from jax.experimental.pallas import tpu as pltpu


# ---------------------------------------------------------------------------
# Small helpers
# ---------------------------------------------------------------------------
def _round_up(x, m):
    return ((x + m - 1) // m) * m


@functools.lru_cache(maxsize=None)
def _combos(order):
    return {r: tuple(itertools.combinations_with_replacement(range(order + 1), r))
            for r in range(1, order + 1)}


def _vmem_budget_bytes():
    """~75% of per-core VMEM (v5e/v6e: 128 MiB, v7x: 64 MiB).  Used both as the
    Mosaic vmem_limit_bytes and as the tile-sizing budget."""
    cap = 64 << 20
    try:
        info = pltpu.get_tpu_info()
        cap = int(getattr(info, "vmem_capacity_bytes", cap) or cap)
    except Exception:
        pass
    cap = min(cap, 128 << 20)
    return int(cap * 3 // 4)


def _choose_tm(n, d_feat, order, budget):
    """Largest node-row tile (multiple of 16, bf16 sublane packing) whose
    per-step VMEM footprint fits the budget; prefer >= 2 grid steps so the
    ('parallel',) row axis can be split across v7x's two TensorCores."""
    cap = _round_up(max(n, 16), 16)
    cands = [t for t in (2048, 1024, 512, 256, 128, 64, 32, 16) if t <= cap]

    def footprint(tm):
        n_p = _round_up(max(n, tm), tm)
        stream = 2 * tm * (n_p * 2                      # A row tile (bf16, double buffered)
                           + d_feat * 4                 # X row tile (f32)
                           + max(order - 2, 0) * d_feat * 2  # intermediate map tiles (bf16)
                           + d_feat * 4)                # output tile (f32)
        resident = (n_p * d_feat * 2                    # highest-power map, single buffered
                    + (order + 1) * d_feat * d_feat * 2  # fused projection weights (bf16)
                    + 8 * d_feat * 4)                   # bias / affine / BN scratch
        return stream + resident

    for prefer_multi in (True, False):
        for tm in cands:
            if footprint(tm) > budget:
                continue
            if prefer_multi and pl.cdiv(n, tm) < 2:
                continue
            return tm
    return 16


def _resident_spec(shape):
    """Grid-invariant input: constant index map, single VMEM buffer."""
    return pl.BlockSpec(shape, lambda i: (0,) * len(shape),
                        pipeline_mode=pl.Buffered(1))


# ---------------------------------------------------------------------------
# Pallas kernels
# ---------------------------------------------------------------------------
def _propagate_kernel(*refs):
    # out[row tile] = A[row tile, :] @ M_eff   (bf16 x bf16, f32 accumulation)
    if len(refs) == 4:
        a_ref, m_ref, aff_ref, out_ref = refs
    else:
        a_ref, m_ref, out_ref = refs
        aff_ref = None
    rhs = m_ref[...]
    if aff_ref is not None:                     # fold the previous BatchNorm affine
        rhs = rhs.astype(jnp.float32) * aff_ref[0:1, :] + aff_ref[1:2, :]
    out_ref[...] = jnp.dot(a_ref[...], rhs.astype(jnp.bfloat16),
                           preferred_element_type=jnp.float32).astype(out_ref.dtype)


def _volterra_layer_kernel(*refs, order, combos, tm, has_affine):
    it = iter(refs)
    a_ref = next(it)                                   # (TM, Np) bf16 adjacency rows
    x_ref = next(it) if order >= 2 else None           # (TM, Din) f32 activation tile
    aff_ref = next(it) if has_affine else None         # (2, Din) folded BatchNorm affine
    mid_refs = [next(it) for _ in range(max(order - 2, 0))]  # (TM, Din) bf16 map tiles
    mlast_ref = next(it)                               # (Np, Din) resident map (bf16/f32)
    w_ref = next(it)                                   # ((order+1)*Din, Dout) bf16
    b_ref = next(it)                                   # (1, Dout) f32 folded bias
    out_ref = next(it)                                 # (TM, Dout) f32

    row0 = pl.multiple_of(pl.program_id(0) * tm, tm)
    a = a_ref[...]                                     # bf16, fed to the MXU directly

    if has_affine:
        scale = aff_ref[0:1, :]
        shift = aff_ref[1:2, :]

    # M_0 = X row tile (f32), with the previous BatchNorm folded in.
    if order >= 2:
        x = x_ref[...]
    else:
        x = mlast_ref[pl.ds(row0, tm), :].astype(jnp.float32)
    if has_affine:
        x = x * scale + shift
    M = [x]

    # M_1 .. M_{order-2}: pre-propagated bf16 row tiles, upcast once.
    for m in mid_refs:
        M.append(m[...].astype(jnp.float32))

    # M_{order-1}: row tile sliced out of the resident map (no duplicate DMA).
    if order >= 2:
        M.append(mlast_ref[pl.ds(row0, tm), :].astype(jnp.float32))

    # M_order = A[tile, :] @ M_{order-1}[all rows]  (native bf16 MXU path).
    rhs = mlast_ref[...]
    if order == 1:                                     # resident map is X itself
        rhs = rhs.astype(jnp.float32)
        if has_affine:
            rhs = rhs * scale + shift
    M.append(jnp.dot(a, rhs.astype(jnp.bfloat16), preferred_element_type=jnp.float32))

    # S_r = sum over order-r combinations of elementwise products (f32, v5e-safe).
    S = [M[0]]
    for r in range(1, order + 1):
        acc = None
        for combo in combos[r]:
            prod = M[combo[0]]
            for p in combo[1:]:
                prod = prod * M[p]
            acc = prod if acc is None else acc + prod
        S.append(acc)

    # Fused projection: one MXU dot with K = (order+1)*Din instead of order+1 dots.
    s_cat = jnp.concatenate(S, axis=-1).astype(jnp.bfloat16)
    out = jnp.dot(s_cat, w_ref[...], preferred_element_type=jnp.float32)
    out_ref[...] = jnp.maximum(out + b_ref[...], 0.0)   # folded bias + ReLU


def _bn_stats_kernel(x_ref, gb_ref, aff_ref, sum_ref, sq_ref, *, n_valid, tm, eps):
    # Row-tiled reduction producing the BatchNorm affine (scale, shift) per column.
    i = pl.program_id(0)

    @pl.when(i == 0)
    def _():
        sum_ref[...] = jnp.zeros_like(sum_ref)
        sq_ref[...] = jnp.zeros_like(sq_ref)

    x = x_ref[...]
    rows = jax.lax.broadcasted_iota(jnp.int32, x.shape, 0) + i * tm
    x = jnp.where(rows < n_valid, x, 0.0)               # mask node-axis padding
    sum_ref[...] += jnp.sum(x, axis=0, keepdims=True)
    sq_ref[...] += jnp.sum(x * x, axis=0, keepdims=True)

    @pl.when(i == pl.num_programs(0) - 1)
    def _():
        inv_n = 1.0 / float(n_valid)
        mean = sum_ref[...] * inv_n
        var = sq_ref[...] * inv_n - mean * mean          # biased variance (training BN)
        inv = jax.lax.rsqrt(var + eps)
        scale = gb_ref[0:1, :] * inv                     # gamma * inv_std
        shift = gb_ref[1:2, :] - mean * scale            # beta - mean * gamma * inv_std
        aff_ref[...] = jnp.concatenate([scale, shift], axis=0)


# ---------------------------------------------------------------------------
# pallas_call wrappers
# ---------------------------------------------------------------------------
def propagate(A, M, affine, tm, vmem_limit):
    """One hop M' = A @ M_eff (bf16 output), row-tiled over padded nodes."""
    n_p = A.shape[0]
    d = M.shape[1]
    in_specs = [pl.BlockSpec((tm, n_p), lambda i: (i, 0)),   # A row tile (bf16)
                _resident_spec(M.shape)]                      # RHS map, resident, 1 buffer
    args = [A, M]
    if affine is not None:
        in_specs.append(_resident_spec(affine.shape))
        args.append(affine)
    return pl.pallas_call(
        _propagate_kernel,
        out_shape=jax.ShapeDtypeStruct((n_p, d), jnp.bfloat16),
        grid=(n_p // tm,),
        in_specs=in_specs,
        out_specs=pl.BlockSpec((tm, d), lambda i: (i, 0)),
        compiler_params=pltpu.CompilerParams(
            dimension_semantics=("parallel",),
            vmem_limit_bytes=int(vmem_limit)),
    )(*args)


def volterra_layer(A, X, affine, W_cat, b_total, order, tm, vmem_limit):
    """One VolterraGraphConvLayer (ReLU included), node-row-parallel grid."""
    n_p, d_in = X.shape
    d_out = W_cat.shape[1]

    # Propagated maps M_1..M_{order-1} in bf16 (first hop folds the BN affine).
    maps, prev, aff = [], X, affine
    for _ in range(order - 1):
        prev = propagate(A, prev, aff, tm, vmem_limit)
        aff = None
        maps.append(prev)
    mlast = maps[-1] if maps else X            # RHS of the in-kernel highest-power dot

    a_spec = pl.BlockSpec((tm, n_p), lambda i: (i, 0))
    feat_tile = pl.BlockSpec((tm, d_in), lambda i: (i, 0))

    in_specs, args = [a_spec], [A]
    if order >= 2:                              # X tile (for order==1 it is sliced
        in_specs.append(feat_tile)              # from the resident copy instead)
        args.append(X)
    if affine is not None:
        in_specs.append(_resident_spec(affine.shape))
        args.append(affine)
    for m in maps[:-1]:                         # intermediate maps: row tiles only
        in_specs.append(feat_tile)
        args.append(m)
    in_specs += [_resident_spec(mlast.shape),   # last map resident (tile sliced in-kernel)
                 _resident_spec(W_cat.shape),
                 _resident_spec(b_total.shape)]
    args += [mlast, W_cat, b_total]

    kernel = functools.partial(_volterra_layer_kernel, order=order,
                               combos=_combos(order), tm=tm,
                               has_affine=affine is not None)
    return pl.pallas_call(
        kernel,
        out_shape=jax.ShapeDtypeStruct((n_p, d_out), jnp.float32),
        grid=(n_p // tm,),
        in_specs=in_specs,
        out_specs=pl.BlockSpec((tm, d_out), lambda i: (i, 0)),
        compiler_params=pltpu.CompilerParams(
            dimension_semantics=("parallel",),
            vmem_limit_bytes=int(vmem_limit)),
    )(*args)


def batch_norm_affine(X, gamma_beta, n_valid, tm, vmem_limit, eps=1e-5):
    """Tiled BN statistics -> per-column (scale, shift), folded into the next layer."""
    n_p, c = X.shape
    kernel = functools.partial(_bn_stats_kernel, n_valid=n_valid, tm=tm, eps=eps)
    return pl.pallas_call(
        kernel,
        out_shape=jax.ShapeDtypeStruct((2, c), jnp.float32),
        grid=(n_p // tm,),
        in_specs=[pl.BlockSpec((tm, c), lambda i: (i, 0)),
                  _resident_spec(gamma_beta.shape)],
        out_specs=pl.BlockSpec((2, c), lambda i: (0, 0)),
        scratch_shapes=[pltpu.VMEM((1, c), jnp.float32),
                        pltpu.VMEM((1, c), jnp.float32)],
        compiler_params=pltpu.CompilerParams(
            dimension_semantics=("arbitrary",),
            vmem_limit_bytes=int(vmem_limit)),
    )(X, gamma_beta)


# ---------------------------------------------------------------------------
# Parameter setup / packing (plain JAX glue)
# ---------------------------------------------------------------------------
def init_volterra_linear_stack(key, in_dim, out_dim, order):
    """order+1 Linear(in_dim, out_dim), torch default init U(-1/sqrt(in), 1/sqrt(in))."""
    ks = jax.random.split(key, 2 * (order + 1))
    bound = 1.0 / float(in_dim) ** 0.5
    Ws, bs = [], []
    for r in range(order + 1):
        W = jax.random.uniform(ks[2 * r], (out_dim, in_dim), jnp.float32, -bound, bound)
        b = jax.random.uniform(ks[2 * r + 1], (out_dim,), jnp.float32, -bound, bound)
        Ws.append(W.T)                          # stored as (in_dim, out_dim)
        bs.append(b.reshape(1, out_dim))
    return jnp.stack(Ws, 0), jnp.stack(bs, 0)   # (order+1, in, out), (order+1, 1, out)


def _pack_layer(Wt, b, order, in_p, out_p):
    """Zero-pad each weight to (in_p, out_p), stack into the fused ((order+1)*in_p,
    out_p) bf16 matrix, and fold every per-combination bias add into one vector."""
    k1, in_dim, out_dim = Wt.shape
    combos = _combos(order)
    Wp = jnp.zeros((k1, in_p, out_p), jnp.float32).at[:, :in_dim, :out_dim].set(Wt)
    W_cat = Wp.reshape(k1 * in_p, out_p).astype(jnp.bfloat16)
    mults = jnp.array([1.0] + [float(len(combos[r])) for r in range(1, order + 1)],
                      jnp.float32).reshape(k1, 1, 1)
    b_total = jnp.sum(mults * b, axis=0)                       # (1, out_dim)
    b_pad = jnp.zeros((1, out_p), jnp.float32).at[:, :out_dim].set(b_total)
    return W_cat, b_pad


def volterra_gcn_forward(X, A, params, order, eps=1e-5):
    assert order >= 1
    (Wt_in, b_in), hidden_params, (Wt_out, b_out), (gamma, beta) = params
    N, in_dim = X.shape
    hidden_dim = Wt_in.shape[2]
    num_outputs = Wt_out.shape[2]

    d_in_p = _round_up(in_dim, 128)
    d_h_p = _round_up(hidden_dim, 128)
    d_out_p = _round_up(num_outputs, 128)
    d_feat = max(d_in_p, d_h_p, d_out_p)

    budget = _vmem_budget_bytes()
    tm = _choose_tm(N, d_feat, order, budget)
    n_p = _round_up(N, tm)

    # Zero-pad node & feature axes; adjacency stored bf16 (0/1 entries are exact).
    A_p = jnp.zeros((n_p, n_p), jnp.bfloat16).at[:N, :N].set(A.astype(jnp.bfloat16))
    X_p = jnp.zeros((n_p, d_in_p), jnp.float32).at[:N, :in_dim].set(X)

    W_in_c, b_in_c = _pack_layer(Wt_in, b_in, order, d_in_p, d_h_p)
    hid_c = [_pack_layer(W, b, order, d_h_p, d_h_p) for (W, b) in hidden_params]
    W_out_c, b_out_c = _pack_layer(Wt_out, b_out, order, d_h_p, d_out_p)
    gb = (jnp.zeros((2, d_h_p), jnp.float32)
          .at[0, :hidden_dim].set(gamma.reshape(-1))
          .at[1, :hidden_dim].set(beta.reshape(-1)))

    Xh = volterra_layer(A_p, X_p, None, W_in_c, b_in_c, order, tm, budget)
    aff = None
    for (Wc, bc) in hid_c:
        Xh = volterra_layer(A_p, Xh, aff, Wc, bc, order, tm, budget)
        aff = batch_norm_affine(Xh, gb, N, tm, budget, eps)   # folded into next layer
    out = volterra_layer(A_p, Xh, aff, W_out_c, b_out_c, order, tm, budget)
    return out[:N, :num_outputs]


# ---------------------------------------------------------------------------
# Pure-JAX f32 reference (PyTorch-faithful form: dense powers, per-combo bias)
# ---------------------------------------------------------------------------
def _ref_build_powers(A, order):
    # PyTorch builds [I, A, ..., A^order]; the normalized A_next it computes is
    # discarded, so the plain powers are what the layers actually use.
    N = A.shape[0]
    powers = [jnp.eye(N, dtype=jnp.float32)]
    for _ in range(order):
        powers.append(powers[-1] @ A)
    return powers


def _ref_layer(X, powers, Wt, b, order):
    M = [P @ X for P in powers]
    out = X @ Wt[0] + b[0]
    for r in range(1, order + 1):
        for combo in itertools.combinations_with_replacement(range(order + 1), r):
            prod = M[combo[0]]
            for idx in combo[1:]:
                prod = prod * M[idx]
            out = out + prod @ Wt[r] + b[r]
    return jnp.maximum(out, 0.0)


def _ref_bn(X, gamma, beta, eps=1e-5):
    mean = jnp.mean(X, axis=0, keepdims=True)
    var = jnp.mean((X - mean) ** 2, axis=0, keepdims=True)
    return (X - mean) / jnp.sqrt(var + eps) * gamma + beta


def ref_forward(X, A, params, order):
    powers = _ref_build_powers(A, order)
    (Wt_in, b_in), hidden_params, (Wt_out, b_out), (gamma, beta) = params
    Xh = _ref_layer(X, powers, Wt_in, b_in, order)
    for (Wt_h, b_h) in hidden_params:
        Xh = _ref_layer(Xh, powers, Wt_h, b_h, order)
        Xh = _ref_bn(Xh, gamma, beta)
    return _ref_layer(Xh, powers, Wt_out, b_out, order)


# ---------------------------------------------------------------------------
if __name__ == "__main__":
    # N=24 is deliberately not a tile multiple: exercises node padding (-> 32),
    # a 2-step row grid, and the folded-BatchNorm path twice.
    N, in_dim, hidden_dim, num_outputs = 24, 4, 32, 8
    order, num_layers = 2, 2

    key = jax.random.PRNGKey(0)
    k_a, k_x, k_in, k_out, *k_hidden = jax.random.split(key, 4 + num_layers)

    # symmetric 0/1 adjacency, zero diagonal
    A = (jax.random.uniform(k_a, (N, N)) < 0.3).astype(jnp.float32)
    A = jnp.maximum(A, A.T) * (1.0 - jnp.eye(N, dtype=jnp.float32))
    X = jax.random.normal(k_x, (N, in_dim), jnp.float32)

    input_p = init_volterra_linear_stack(k_in, in_dim, hidden_dim, order)
    hidden_p = [init_volterra_linear_stack(k, hidden_dim, hidden_dim, order)
                for k in k_hidden]
    out_p = init_volterra_linear_stack(k_out, hidden_dim, num_outputs, order)
    gamma = jnp.ones((hidden_dim,), jnp.float32)   # BatchNorm1d affine params
    beta = jnp.zeros((hidden_dim,), jnp.float32)
    # TODO(synk): BatchNorm1d running-stat buffer updates (training-side mutation)
    # are not replicated; only the training-mode normalization used by forward() is.

    params = (input_p, hidden_p, out_p, (gamma, beta))

    out = volterra_gcn_forward(X, A, params, order)
    out = jax.block_until_ready(out)

    expected = ref_forward(X, A, params, order)
    assert out.shape == (N, num_outputs)
    # bf16 MXU inputs / bf16 intermediate maps (an intentional perf/precision trade
    # per the review) compound through the order-2 products over 4 layers, so the
    # comparison against the pure-f32 reference uses a bf16-appropriate tolerance.
    err = float(jnp.max(jnp.abs(out - expected)) /
                (jnp.maximum(jnp.max(jnp.abs(expected)), 1.0)))
    assert err < 0.1, f"mismatch vs f32 reference: normalized max error {err:.3g}"

    print("KERNEL_OK")
</pallas_src>

<mosaic_0001>
module attributes {stable_mosaic.version = 11 : i64} {
  func.func @_propagate_kernel(%arg0: i32, %arg1: memref<16x32xbf16, #tpu.memory_space<vmem>>, %arg2: memref<32x128xf32, #tpu.memory_space<vmem>>, %arg3: memref<16x128xbf16, #tpu.memory_space<vmem>>) attributes {dimension_semantics = [#tpu.dimension_semantics<parallel>], iteration_bounds = array<i64: 2>, scalar_prefetch = 0 : i64, scratch_operands = 0 : i64, tpu.core_type = #tpu.core_type<tc>, window_params = [{transform_indices = @transform_0, window_bounds = array<i64: 16, 32>}, {pipeline_mode = #tpu.pipeline_mode<synchronous>, transform_indices = @transform_1, window_bounds = array<i64: 32, 128>}, {transform_indices = @transform_2, window_bounds = array<i64: 16, 128>}]} {
    %c0 = arith.constant 0 : index
    %c0_0 = arith.constant 0 : index
    %0 = vector.load %arg2[%c0, %c0_0] : memref<32x128xf32, #tpu.memory_space<vmem>>, vector<32x128xf32>
    %c0_1 = arith.constant 0 : index
    %c0_2 = arith.constant 0 : index
    %1 = vector.load %arg1[%c0_1, %c0_2] : memref<16x32xbf16, #tpu.memory_space<vmem>>, vector<16x32xbf16>
    %2 = arith.truncf %0 : vector<32x128xf32> to vector<32x128xbf16>
    %cst = arith.constant dense<0.000000e+00> : vector<16x128xf32>
    %3 = tpu.matmul %1, %2, %cst {dimension_numbers = #tpu.dot_dimension_numbers<[1], [0], [0], [1], [0, 0, 1, 1], [], []>} : vector<16x32xbf16>, vector<32x128xbf16>, vector<16x128xf32> -> vector<16x128xf32>
    %4 = arith.truncf %3 : vector<16x128xf32> to vector<16x128xbf16>
    %c0_3 = arith.constant 0 : index
    %c0_4 = arith.constant 0 : index
    %5 = vector.load %arg3[%c0_3, %c0_4] : memref<16x128xbf16, #tpu.memory_space<vmem>>, vector<16x128xbf16>
    tpu.vector_store %arg3[%c0_3, %c0_4], %4 {strides = array<i32>} : memref<16x128xbf16, #tpu.memory_space<vmem>>, vector<16x128xbf16>,
    return
  }
  func.func @transform_0(%arg0: i32) -> (i32, i32) {
    %c0_i32 = arith.constant 0 : i32
    %c0_i32_0 = arith.constant 0 : i32
    return %arg0, %c0_i32 : i32, i32
  }
  func.func @transform_1(%arg0: i32) -> (i32, i32) {
    %c0_i32 = arith.constant 0 : i32
    %c0_i32_0 = arith.constant 0 : i32
    %c0_i32_1 = arith.constant 0 : i32
    return %c0_i32, %c0_i32_0 : i32, i32
  }
  func.func @transform_2(%arg0: i32) -> (i32, i32) {
    %c0_i32 = arith.constant 0 : i32
    %c0_i32_0 = arith.constant 0 : i32
    return %arg0, %c0_i32 : i32, i32
  }
}

</mosaic_0001>

<llo_original>
// kernel: tpu_custom_call.1
$region0: #{tpu_custom_call.1}
  #allocation0 [shape = 'u32[]', space=smem, size = 0x4, offset = 0x4, fixed_abs, tag = 'smem constant byte address 0x4 - core index']
  #allocation1 [shape = 'u32[144,128]{1,0:T(1,128)}', space=vmem, size = 0x12000, scoped, tag = 'internal scratch']
  %s0 = inlined_call_operand.hbm [shape: bf16[32,32], index: 0, kind: input, shape index: {}]
  %s1 = inlined_call_operand.hbm [shape: f32[32,128], index: 1, kind: input, shape index: {}]
  %s2 = inlined_call_operand.hbm [shape: bf16[32,128], index: 2, kind: output, shape index: {}]
  %s3 = sld [smem:[#allocation0]]
  $region49: #{tpu_custom_call.1} parent=0
    _
  %s5 = ssub.s32 1, %s3
  %s6 = scalar_select 0, %s5, %s3
  $region1: #{tpu_custom_call.1} parent=0
    #allocation2 [shape = 'u8[8192]{0}', space=vmem, size = 0x2000, scoped, tag = 'input window, operand 0']
    #allocation3 [shape = 's32[2]{0}', space=sflag, size = 0x8, scoped, tag = 'scoped memory for tpu_custom_call.1']
    #allocation4 [shape = 's32[2]{0}', space=sflag, size = 0x8, scoped, tag = 'scoped memory for tpu_custom_call.1']
    #allocation5 [shape = 'u8[16384]{0}', space=vmem, size = 0x4000, scoped, tag = 'input window, operand 1, single buffered']
    #allocation6 [shape = 's32[1]{0}', space=sflag, size = 0x4, scoped, tag = 'scoped memory for tpu_custom_call.1']
    #allocation7 [shape = 'u8[8192]{0}', space=vmem, size = 0x2000, scoped, tag = 'output window, operand 0']
    %7 = vsyncpa [#allocation3], 0
    %s8 = scalar_lea.sflag [#allocation3], 1
    %9 = vsyncpa %s8, 0
    %10 = vsyncpa [#allocation6], 0
    %11 = vsyncpa [#allocation4], 0
    %s12 = scalar_lea.sflag [#allocation4], 1
    %13 = vsyncpa %s12, 0
    loop: start=0, step=1, limit=4
    $region2: #{tpu_custom_call.1} parent=1 // loop_pre_header
      _
    $region3: #{tpu_custom_call.1} parent=1 // loop_header
      %s15 = sphi 0, %s19
      %p16 = scmp.ge.s32.totalorder %s15, 4
      %s25 = sphi 0, %s27
      %s28 = sphi 0, %s25
      %s29 = sphi 0, %s28
      %s45 = sphi 0, %s29
      %s49 = sphi 0, %s49
      %s51 = sphi 0, %s49
      %s52 = sphi 0, %s51
      %s66 = sphi 0, %s52
      %s72 = sphi 0, %s74
      %s75 = sphi 0, %s72
      %s76 = sphi 0, %s75
      %s92 = sphi 0, %s76
    $region4: #{tpu_custom_call.1} parent=1 // loop_header_branch
      %18 = sbr.rel (%p16) target = $region8
    $region5: #{tpu_custom_call.1} parent=1 // loop_body
      %s20 = ssub.s32 %s15, 1
      %s21 = ssub.s32 %s15, 2
      %s22 = sadd.s32 %s15, 1
      %s23 = ssub.s32 %s15, %s22
      %p24 = scmp.eq.s32.totalorder %s23, 0
      %s26 = sadd.s32 %s25, 1
      %s27 = scalar_select %p24, %s25, %s26
      %p30 = pneg %p24
      %p31 = scmp.eq.s32.totalorder %s15, 1
      %p32 = por %p30, %p31
      %p33 = scmp.ne.s32.totalorder %s25, %s28
      %p34 = scmp.eq.s32.totalorder %s15, 0
      %p35 = por %p33, %p34
      %p36 = scmp.ne.s32.totalorder %s25, %s28
      %p37 = scmp.eq.s32.totalorder %s20, 1
      %p38 = por %p36, %p37
      %p39 = scmp.ne.s32.totalorder %s28, %s29
      %p40 = scmp.eq.s32.totalorder %s20, 0
      %p41 = por %p39, %p40
      %p42 = scmp.ne.s32.totalorder %s28, %s29
      %p43 = scmp.eq.s32.totalorder %s21, 1
      %p44 = por %p42, %p43
      %p46 = scmp.ne.s32.totalorder %s29, %s45
      %p47 = scmp.eq.s32.totalorder %s21, 0
      %p48 = por %p46, %p47
      %s50 = sadd.s32 %s49, 1
      %p53 = scmp.eq.s32.totalorder %s15, 1
      %p54 = scmp.ne.s32.totalorder %s49, %s51
      %p55 = scmp.eq.s32.totalorder %s15, 0
      %p56 = por %p54, %p55
      %p57 = scmp.ne.s32.totalorder %s49, %s51
      %p58 = scmp.eq.s32.totalorder %s20, 1
      %p59 = por %p57, %p58
      %p60 = scmp.ne.s32.totalorder %s51, %s52
      %p61 = scmp.eq.s32.totalorder %s20, 0
      %p62 = por %p60, %p61
      %p63 = scmp.ne.s32.totalorder %s51, %s52
      %p64 = scmp.eq.s32.totalorder %s21, 1
      %p65 = por %p63, %p64
      %p67 = scmp.ne.s32.totalorder %s52, %s66
      %p68 = scmp.eq.s32.totalorder %s21, 0
      %p69 = por %p67, %p68
      %s70 = ssub.s32 %s15, %s22
      %p71 = scmp.eq.s32.totalorder %s70, 0
      %s73 = sadd.s32 %s72, 1
      %s74 = scalar_select %p71, %s72, %s73
      %p77 = pneg %p71
      %p78 = scmp.eq.s32.totalorder %s15, 1
      %p79 = por %p77, %p78
      %p80 = scmp.ne.s32.totalorder %s72, %s75
      %p81 = scmp.eq.s32.totalorder %s15, 0
      %p82 = por %p80, %p81
      %p83 = scmp.ne.s32.totalorder %s72, %s75
      %p84 = scmp.eq.s32.totalorder %s20, 1
      %p85 = por %p83, %p84
      %p86 = scmp.ne.s32.totalorder %s75, %s76
      %p87 = scmp.eq.s32.totalorder %s20, 0
      %p88 = por %p86, %p87
      %p89 = scmp.ne.s32.totalorder %s75, %s76
      %p90 = scmp.eq.s32.totalorder %s21, 1
      %p91 = por %p89, %p90
      %p93 = scmp.ne.s32.totalorder %s76, %s92
      %p94 = scmp.eq.s32.totalorder %s21, 0
      %p95 = por %p93, %p94
      %p96 = scmp.le.s32.totalorder 1, %s15
      %p97 = scmp.lt.s32.totalorder %s15, 3
      %p98 = pnand %p96, %p97
      %p99 = pneg %p98
      // Predicated region
      $region9: #{tpu_custom_call.1} parent=5 // pred_check
        _
      $region10: #{tpu_custom_call.1} parent=5 // pred_check_branch
        %101 = sbr.rel (%p98) target = $region12
      $region11: #{tpu_custom_call.1} parent=5 // pred_region
        %s102 = ssub.s32 %s15, 1
        // Predicated region
        $region13: #{tpu_custom_call.1} parent=11 // pred_check
          %p103 = pneg %p62
        $region14: #{tpu_custom_call.1} parent=11 // pred_check_branch
          %105 = sbr.rel (%p103) target = $region16
        $region15: #{tpu_custom_call.1} parent=11 // pred_region
          %s107 = ssub.s32 512, 512
          %108 = vsyncadd [#allocation6], %s107
          %s109 = sshll.u32 [#allocation5], 4
          %s110 = int_to_ptr.vmem [resolvable:$true] %s109
          %115 = dma.hbm_to_vmem [thread:$0]  %s1, 512, %s110, [#allocation6], 128, 128, 8
        $region16: #{tpu_custom_call.1} parent=11 // pred_fallthru
          _
      $region12: #{tpu_custom_call.1} parent=5 // pred_fallthru
        _
      %p116 = scmp.lt.s32.totalorder %s15, 2
      // Predicated region
      $region17: #{tpu_custom_call.1} parent=5 // pred_check
        %p117 = pneg %p116
      $region18: #{tpu_custom_call.1} parent=5 // pred_check_branch
        %119 = sbr.rel (%p117) target = $region20
      $region19: #{tpu_custom_call.1} parent=5 // pred_region
        // Predicated region
        $region21: #{tpu_custom_call.1} parent=19 // pred_check
          %p120 = pneg %p35
        $region22: #{tpu_custom_call.1} parent=19 // pred_check_branch
          %122 = sbr.rel (%p120) target = $region24
        $region23: #{tpu_custom_call.1} parent=19 // pred_region
          %s123 = sand.u32 %s25, 1
          %s124 = scalar_lea.sflag [#allocation3], %s123
          %s125 = sand.u32 %s25, 1
          %s126 = smul.addr %s125, 8
          %s127 = scalar_lea.vmem [#allocation2], %s126
          %s128 = smul.u32 2, %s15
          %s130 = ssub.s32 128, 128
          %131 = vsyncadd %s124, %s130
          %s132 = smul.addr %s128, 64
          %s133 = scalar_lea.hbm %s0, %s132
          %s134 = sshll.u32 %s127, 4
          %s135 = int_to_ptr.vmem [resolvable:$true] %s134
          %140 = dma.hbm_to_vmem [thread:$0]  %s133, 128, %s135, %s124, 64, 64, 4
        $region24: #{tpu_custom_call.1} parent=19 // pred_fallthru
          _
      $region20: #{tpu_custom_call.1} parent=5 // pred_fallthru
        _
      %p141 = scmp.le.s32.totalorder 1, %s15
      %p142 = scmp.lt.s32.totalorder %s15, 3
      %p143 = pnand %p141, %p142
      %p144 = pneg %p143
      // Predicated region
      $region25: #{tpu_custom_call.1} parent=5 // pred_check
        _
      $region26: #{tpu_custom_call.1} parent=5 // pred_check_branch
        %146 = sbr.rel (%p143) target = $region28
      $region27: #{tpu_custom_call.1} parent=5 // pred_region
        %s147 = ssub.s32 %s15, 1
        %s148 = sand.u32 %s28, 1
        %s149 = scalar_lea.sflag [#allocation3], %s148
        %s150 = sand.u32 %s28, 1
        %s151 = smul.addr %s150, 8
        %s152 = scalar_lea.vmem [#allocation2], %s151
        // Predicated region
        $region29: #{tpu_custom_call.1} parent=27 // pred_check
          %p153 = pneg %p41
        $region30: #{tpu_custom_call.1} parent=27 // pred_check_branch
          %155 = sbr.rel (%p153) target = $region32
        $region31: #{tpu_custom_call.1} parent=27 // pred_region
          %156 = dma.done %s149, 128
        $region32: #{tpu_custom_call.1} parent=27 // pred_fallthru
          _
        // Predicated region
        $region33: #{tpu_custom_call.1} parent=27 // pred_check
          %p157 = pneg %p62
        $region34: #{tpu_custom_call.1} parent=27 // pred_check_branch
          %159 = sbr.rel (%p157) target = $region36
        $region35: #{tpu_custom_call.1} parent=27 // pred_region
          %160 = dma.done [#allocation6], 512
        $region36: #{tpu_custom_call.1} parent=27 // pred_fallthru
          _
        %s161 = sand.u32 %s28, 1
        %s162 = scalar_lea.sflag [#allocation3], %s161
        %s163 = sand.u32 %s28, 1
        %s164 = smul.addr %s163, 8
        %s165 = scalar_lea.vmem [#allocation2], %s164
        %p166 = pneg %p41
        %p167 = pneg %p38
        %p168 = pneg %p62
        %p169 = pneg %p59
        %p170 = pneg %p88
        %p171 = pneg %p85
        %s172 = sand.u32 %s75, 1
        %s173 = scalar_lea.sflag [#allocation4], %s172
        %s174 = sand.u32 %s75, 1
        %s175 = smul.addr %s174, 8
        %s176 = scalar_lea.vmem [#allocation7], %s175
        %s177 = smul.u32 2, %s20
        %s178 = smul.u32 2, %s20
        %v180 = vld [vmem:[#allocation5] sm:$0xff]
        %v181 = vld [vmem:[#allocation5 + $0x8] sm:$0xff]
        %v182 = vld [vmem:[#allocation5 + $0x10] sm:$0xff]
        %v183 = vld [vmem:[#allocation5 + $0x18] sm:$0xff]
        %v184 = vld [vmem:[%s152] sm:$0xf]
        %v185 = vld [vmem:[%s152 + $0x4] sm:$0xf]
        %v186 = vpack.c.bf16 %v181, %v180
        %v187 = vpack.c.bf16 %v183, %v182
        %v190 = vunpack.c.l.b16 %v184
        %v191 = vunpack.c.l.b16 %v185
        %v192 = vpack.c.b16 %v191, %v190
        %vm193 = vcmask 261120
        %v195 = vsel %vm193, %v192, 0
        %197 = vmatprep.subr.bf16.mxu0 0
        %198 = vmatpush1.bf16.msra.mxu0 %v186
        %199 = vmatprep.subr.bf16.mxu0 0
        %200 = vmatpush1.bf16.msra.mxu0 %v187
        %201 = vmatprep.subr.bf16.mxu0 0
        %202 = vmatpush1.bf16.msra.mxu0 0
        %203 = vmatprep.subr.bf16.mxu0 0
        %204 = vmatpush1.bf16.msra.mxu0 0
        %205 = vmatprep.subr.bf16.mxu0 0
        %206 = vmatpush1.bf16.msra.mxu0 0
        %207 = vmatprep.subr.bf16.mxu0 0
        %208 = vmatpush1.bf16.msra.mxu0 0
        %209 = vmatprep.subr.bf16.mxu0 0
        %210 = vmatpush1.bf16.msra.mxu0 0
        %211 = vmatprep.subr.bf16.mxu0 0
        %212 = vmatpush1.bf16.msra.mxu0 0
        %213 = vmatprep.subr.bf16.mxu0 0
        %214 = vmatpush1.bf16.msra.mxu0 0
        %215 = vmatprep.subr.bf16.mxu0 0
        %216 = vmatpush1.bf16.msra.mxu0 0
        %217 = vmatprep.subr.bf16.mxu0 0
        %218 = vmatpush1.bf16.msra.mxu0 0
        %219 = vmatprep.subr.bf16.mxu0 0
        %220 = vmatpush1.bf16.msra.mxu0 0
        %221 = vmatprep.subr.bf16.mxu0 0
        %222 = vmatpush1.bf16.msra.mxu0 0
        %223 = vmatprep.subr.bf16.mxu0 0
        %224 = vmatpush1.bf16.msra.mxu0 0
        %225 = vmatprep.subr.bf16.mxu0 0
        %226 = vmatpush1.bf16.msra.mxu0 0
        %227 = vmatprep.subr.bf16.mxu0 0
        %228 = vmatpush1.bf16.msra.mxu0 0
        %229 = vmatprep.mubr.bf16.mxu0 0
        %230 = vmatmul.mubr.bf16.gmra.mrb[0].mxu0 %v195
        %v231 = vpop.f32.mrb[0].mxu0
        %v232 = vadd.f32 0.0, %v231
        %v233 = vpop.f32.mrb[0].mxu0
        %v234 = vpop.f32.mrb[0].mxu0
        %v235 = vadd.f32 0.0, %v234
        %v236 = vpop.f32.mrb[0].mxu0
        %237 = vdwg.mxu0
        %v238 = vpack.c.bf16 %v235, %v232
        %v240 = vunpack.c.l.b16 %v238
        %v241 = vunpack.c.h.b16 %v238
        %v242 = vpack.c.b16 %v240, %v240
        %v243 = vpack.c.b16 %v241, %v241
        %246 = vst [vmem:[%s176] sm:$0xf] %v242
        %247 = vst [vmem:[%s176 + $0x4] sm:$0xf] %v243
        %s248 = sand.u32 %s75, 1
        %s249 = scalar_lea.sflag [#allocation4], %s248
        %s250 = sand.u32 %s75, 1
        %s251 = smul.addr %s250, 8
        %s252 = scalar_lea.vmem [#allocation7], %s251
        // Predicated region
        $region37: #{tpu_custom_call.1} parent=27 // pred_check
          %p253 = pneg %p85
        $region38: #{tpu_custom_call.1} parent=27 // pred_check_branch
          %255 = sbr.rel (%p253) target = $region40
        $region39: #{tpu_custom_call.1} parent=27 // pred_region
          %s256 = smul.u32 2, %s20
          %s258 = ssub.s32 128, 128
          %259 = vsyncadd %s249, %s258
          %s260 = smul.addr %s256, 64
          %s261 = scalar_lea.hbm %s2, %s260
          %s262 = sshll.u32 %s252, 4
          %s263 = int_to_ptr.vmem [resolvable:$true] %s262
          %268 = dma.vmem_to_hbm [thread:$0]  %s263, 128, %s261, %s249, 64, 64, 4
        $region40: #{tpu_custom_call.1} parent=27 // pred_fallthru
          _
      $region28: #{tpu_custom_call.1} parent=5 // pred_fallthru
        _
      %p269 = scmp.le.s32.totalorder 2, %s15
      // Predicated region
      $region41: #{tpu_custom_call.1} parent=5 // pred_check
        %p270 = pneg %p269
      $region42: #{tpu_custom_call.1} parent=5 // pred_check_branch
        %272 = sbr.rel (%p270) target = $region44
      $region43: #{tpu_custom_call.1} parent=5 // pred_region
        %s273 = ssub.s32 %s15, 2
        // Predicated region
        $region45: #{tpu_custom_call.1} parent=43 // pred_check
          %p274 = pneg %p91
        $region46: #{tpu_custom_call.1} parent=43 // pred_check_branch
          %276 = sbr.rel (%p274) target = $region48
        $region47: #{tpu_custom_call.1} parent=43 // pred_region
          %s277 = sand.u32 %s76, 1
          %s278 = scalar_lea.sflag [#allocation4], %s277
          %s279 = sand.u32 %s76, 1
          %s280 = smul.addr %s279, 8
          %s281 = scalar_lea.vmem [#allocation7], %s280
          %282 = dma.done %s278, 128
        $region48: #{tpu_custom_call.1} parent=43 // pred_fallthru
          _
      $region44: #{tpu_custom_call.1} parent=5 // pred_fallthru
        _
    $region6: #{tpu_custom_call.1} parent=1 // loop_footer
      %s19 = sadd.s32 1, %s15
    $region7: #{tpu_custom_call.1} parent=1 // loop_footer_branch
      %14 = sbr.rel target = $region3
    $region8: #{tpu_custom_call.1} parent=1 // loop_exit
      _
    %283 = vsyncpa [#allocation3], 1
    %s284 = scalar_lea.sflag [#allocation3], 1
    %285 = vsyncpa %s284, 1
    %286 = vsyncpa [#allocation6], 1
    %287 = vsyncpa [#allocation4], 1
    %s288 = scalar_lea.sflag [#allocation4], 1
    %289 = vsyncpa %s288, 1

</llo_original>
